<compile_context>
chip_gen: v6e
topology: v6e:2x2x1
jax: 0.10.0
libtpu: 0.0.40
codegen_flags: <defaults>
</compile_context>

<pallas_src>
import functools

import jax
import jax.numpy as jnp
from jax import lax
from jax.experimental import pallas as pl
from jax.experimental.pallas import tpu as pltpu


def _round_up(x: int, m: int) -> int:
    return ((x + m - 1) // m) * m


def _scatter_kernel(idx_col_ref, idx_row_ref, x_ref, o_ref, *, M, T_HW, scatter_type):
    # idx_col_ref block: (1, M, 1) int32
    # idx_row_ref block: (1, 1, M) int32   (only used for 'cover')
    # x_ref       block: (1, M, N) float32
    # o_ref       block: (1, N, T_HW) float32
    t = pl.program_id(1)
    idx_col = idx_col_ref[0]                                           # (M, 1)

    hw_iota = lax.broadcasted_iota(jnp.int32, (M, T_HW), 1) + t * T_HW  # (M, T_HW)
    oh = (idx_col == hw_iota).astype(jnp.float32)                       # (M, T_HW)

    if scatter_type == "cover":
        # Keep only the last (largest m) writer per spatial index.
        # Pure VPU O(M^2) duplicate test -- no second matmul.
        idx_row = idx_row_ref[0]                                        # (1, M)
        eq = (idx_col == idx_row)                                       # (M, M)
        r = lax.broadcasted_iota(jnp.int32, (M, M), 0)
        c = lax.broadcasted_iota(jnp.int32, (M, M), 1)
        later = jnp.logical_and(eq, c > r)                              # (M, M)
        n_later = jnp.sum(later.astype(jnp.int32), axis=1, keepdims=True)  # (M, 1)
        keep = (n_later == 0).astype(jnp.float32)                       # (M, 1)
        oh = oh * keep

    # out[n, hw] = sum_m x[m, n] * oh[m, hw]   (contract over M; x fed untransposed)
    out = lax.dot_general(
        x_ref[0], oh,
        dimension_numbers=(((0,), (0,)), ((), ())),
        preferred_element_type=jnp.float32,
        precision=lax.Precision.HIGHEST,
    )                                                                   # (N, T_HW)
    o_ref[0] = out.astype(o_ref.dtype)


def scatter_connection(x, spatial_size, location, scatter_type="add"):
    """Pallas implementation of ScatterConnection.forward.

    x:        (B, M, N) float32
    location: (B, M, 2) int (y, x)
    returns:  (B, N, H, W) float32
    """
    assert scatter_type in ("add", "cover")
    B, M, N = x.shape
    H, W = spatial_size
    HW = H * W

    # glue (plain JAX, tiny arrays): flat spatial index in column and row form
    indices = (location[:, :, 1] + location[:, :, 0] * W).astype(jnp.int32)  # (B, M)
    idx_col = indices.reshape(B, M, 1)
    idx_row = indices.reshape(B, 1, M)

    # Lane-dense HW tile: multiple of 128, capped at 2048 (VMEM-safe on v7x).
    T_HW = min(2048, _round_up(HW, 128))
    HW_pad = _round_up(HW, T_HW)
    n_hw_tiles = HW_pad // T_HW

    kernel = functools.partial(
        _scatter_kernel, M=M, T_HW=T_HW, scatter_type=scatter_type
    )

    out_flat = pl.pallas_call(
        kernel,
        out_shape=jax.ShapeDtypeStruct((B, N, HW_pad), jnp.float32),
        grid=(B, n_hw_tiles),
        in_specs=[
            pl.BlockSpec((1, M, 1), lambda b, t: (b, 0, 0)),
            pl.BlockSpec((1, 1, M), lambda b, t: (b, 0, 0)),
            pl.BlockSpec((1, M, N), lambda b, t: (b, 0, 0)),
        ],
        out_specs=pl.BlockSpec((1, N, T_HW), lambda b, t: (b, 0, t)),
        compiler_params=pltpu.CompilerParams(
            dimension_semantics=("parallel", "parallel")
        ),
    )(idx_col, idx_row, x.astype(jnp.float32))

    if HW_pad != HW:
        out_flat = out_flat[:, :, :HW]
    return out_flat.reshape(B, N, H, W)


# ----------------------------- references (pure JAX) -----------------------------

def _reference_add(x, spatial_size, location):
    B, M, N = x.shape
    H, W = spatial_size
    idx = (location[:, :, 1] + location[:, :, 0] * W).astype(jnp.int32)   # (B, M)
    bidx = jnp.broadcast_to(jnp.arange(B)[:, None], (B, M))
    out = jnp.zeros((B, H * W, N), jnp.float32)
    out = out.at[bidx, idx].add(x.astype(jnp.float32))
    return jnp.transpose(out, (0, 2, 1)).reshape(B, N, H, W)


def _reference_cover(x, spatial_size, location):
    # deterministic last-writer-wins (matches the kernel's 'cover' semantics)
    B, M, N = x.shape
    H, W = spatial_size
    idx = (location[:, :, 1] + location[:, :, 0] * W).astype(jnp.int32)   # (B, M)
    out = jnp.zeros((B, H * W, N), jnp.float32)
    barange = jnp.arange(B)
    for m in range(M):
        out = out.at[barange, idx[:, m]].set(x[:, m].astype(jnp.float32))
    return jnp.transpose(out, (0, 2, 1)).reshape(B, N, H, W)


# TODO(synk): the rest of Encoder (MLPs, Transformer blocks, ResNet conv stack,
# fc_block/LayerNorm heads) are standard dense ops best left to XLA; only the
# ScatterConnection scatter is expressed as a Pallas kernel here.

if __name__ == "__main__":
    key = jax.random.PRNGKey(0)
    B, M, N = 2, 8, 32
    H, W = 16, 16

    kx, ky, kxx = jax.random.split(key, 3)
    x = jax.random.normal(kx, (B, M, N), dtype=jnp.float32)
    loc_y = jax.random.randint(ky, (B, M, 1), 0, H, dtype=jnp.int32)
    loc_x = jax.random.randint(kxx, (B, M, 1), 0, W, dtype=jnp.int32)
    location = jnp.concatenate([loc_y, loc_x], axis=-1)  # (B, M, 2) as (y, x)

    # 'add' mode
    out = jax.block_until_ready(scatter_connection(x, (H, W), location, "add"))
    ref = _reference_add(x, (H, W), location)
    assert out.shape == (B, N, H, W)
    assert jnp.allclose(out, ref, atol=1e-5, rtol=1e-5), "add mode mismatch"

    # 'cover' mode (deterministic last-writer-wins)
    out_c = jax.block_until_ready(scatter_connection(x, (H, W), location, "cover"))
    ref_c = _reference_cover(x, (H, W), location)
    assert out_c.shape == (B, N, H, W)
    assert jnp.allclose(out_c, ref_c, atol=1e-5, rtol=1e-5), "cover mode mismatch"

    # non-128-multiple H*W exercises the lane-padding path
    H2, W2 = 10, 13
    ky2, kx2 = jax.random.split(jax.random.PRNGKey(1))
    loc2 = jnp.concatenate(
        [jax.random.randint(ky2, (B, M, 1), 0, H2, dtype=jnp.int32),
         jax.random.randint(kx2, (B, M, 1), 0, W2, dtype=jnp.int32)], axis=-1)
    out2 = jax.block_until_ready(scatter_connection(x, (H2, W2), loc2, "add"))
    ref2 = _reference_add(x, (H2, W2), loc2)
    assert out2.shape == (B, N, H2, W2)
    assert jnp.allclose(out2, ref2, atol=1e-5, rtol=1e-5), "padded add mismatch"

    print("KERNEL_OK")
</pallas_src>

<mosaic_0001>
module attributes {stable_mosaic.version = 11 : i64} {
  func.func @_scatter_kernel(%arg0: i32, %arg1: i32, %arg2: memref<1x8x1xi32, #tpu.memory_space<vmem>>, %arg3: memref<1x1x8xi32, #tpu.memory_space<vmem>>, %arg4: memref<1x8x32xf32, #tpu.memory_space<vmem>>, %arg5: memref<1x32x256xf32, #tpu.memory_space<vmem>>) attributes {dimension_semantics = [#tpu.dimension_semantics<parallel>, #tpu.dimension_semantics<parallel>], iteration_bounds = array<i64: 2, 1>, scalar_prefetch = 0 : i64, scratch_operands = 0 : i64, tpu.core_type = #tpu.core_type<tc>, window_params = [{transform_indices = @transform_0, window_bounds = array<i64: 1, 8, 1>}, {transform_indices = @transform_1, window_bounds = array<i64: 1, 1, 8>}, {transform_indices = @transform_2, window_bounds = array<i64: 1, 8, 32>}, {transform_indices = @transform_3, window_bounds = array<i64: 1, 32, 256>}]} {
    %c0 = arith.constant 0 : index
    %c0_0 = arith.constant 0 : index
    %c0_1 = arith.constant 0 : index
    %0 = vector.load %arg2[%c0, %c0_0, %c0_1] : memref<1x8x1xi32, #tpu.memory_space<vmem>>, vector<1x8x1xi32>
    %1 = vector.shape_cast %0 : vector<1x8x1xi32> to vector<8x1xi32>
    %2 = tpu.iota {dimensions = array<i32: 1>} : vector<8x256xi32>
    %c256_i32 = arith.constant 256 : i32
    %3 = arith.muli %arg1, %c256_i32 : i32
    %4 = vector.broadcast %3 : i32 to vector<8x256xi32>
    %5 = arith.addi %2, %4 : vector<8x256xi32>
    %6 = vector.broadcast %1 : vector<8x1xi32> to vector<8x256xi32>
    %7 = arith.cmpi eq, %6, %5 : vector<8x256xi32>
    %8 = arith.extui %7 : vector<8x256xi1> to vector<8x256xi32>
    %9 = arith.sitofp %8 : vector<8x256xi32> to vector<8x256xf32>
    %c0_2 = arith.constant 0 : index
    %c0_3 = arith.constant 0 : index
    %c0_4 = arith.constant 0 : index
    %10 = vector.load %arg4[%c0_2, %c0_3, %c0_4] : memref<1x8x32xf32, #tpu.memory_space<vmem>>, vector<1x8x32xf32>
    %11 = vector.shape_cast %10 : vector<1x8x32xf32> to vector<8x32xf32>
    %cst = arith.constant dense<0.000000e+00> : vector<32x256xf32>
    %12 = tpu.matmul %11, %9, %cst {dimension_numbers = #tpu.dot_dimension_numbers<[0], [0], [1], [1], [0, 1, 1, 1], [], []>, precision = #tpu.contract_precision<fp32>} : vector<8x32xf32>, vector<8x256xf32>, vector<32x256xf32> -> vector<32x256xf32>
    %c0_5 = arith.constant 0 : index
    %c0_6 = arith.constant 0 : index
    %c0_7 = arith.constant 0 : index
    %13 = vector.load %arg5[%c0_5, %c0_6, %c0_7] : memref<1x32x256xf32, #tpu.memory_space<vmem>>, vector<1x32x256xf32>
    %14 = vector.shape_cast %13 : vector<1x32x256xf32> to vector<32x256xf32>
    %15 = vector.shape_cast %12 : vector<32x256xf32> to vector<1x32x256xf32>
    tpu.vector_store %arg5[%c0_5, %c0_6, %c0_7], %15 {strides = array<i32>} : memref<1x32x256xf32, #tpu.memory_space<vmem>>, vector<1x32x256xf32>,
    return
  }
  func.func @transform_0(%arg0: i32, %arg1: i32) -> (i32, i32, i32) {
    %c0_i32 = arith.constant 0 : i32
    %c0_i32_0 = arith.constant 0 : i32
    %c0_i32_1 = arith.constant 0 : i32
    return %arg0, %c0_i32, %c0_i32_0 : i32, i32, i32
  }
  func.func @transform_1(%arg0: i32, %arg1: i32) -> (i32, i32, i32) {
    %c0_i32 = arith.constant 0 : i32
    %c0_i32_0 = arith.constant 0 : i32
    %c0_i32_1 = arith.constant 0 : i32
    return %arg0, %c0_i32, %c0_i32_0 : i32, i32, i32
  }
  func.func @transform_2(%arg0: i32, %arg1: i32) -> (i32, i32, i32) {
    %c0_i32 = arith.constant 0 : i32
    %c0_i32_0 = arith.constant 0 : i32
    %c0_i32_1 = arith.constant 0 : i32
    return %arg0, %c0_i32, %c0_i32_0 : i32, i32, i32
  }
  func.func @transform_3(%arg0: i32, %arg1: i32) -> (i32, i32, i32) {
    %c0_i32 = arith.constant 0 : i32
    %c0_i32_0 = arith.constant 0 : i32
    return %arg0, %c0_i32, %arg1 : i32, i32, i32
  }
}

</mosaic_0001>

<llo_original>
// kernel: tpu_custom_call.1
$region0: #{tpu_custom_call.1}
  #allocation0 [shape = 'u32[]', space=smem, size = 0x4, offset = 0x4, fixed_abs, tag = 'smem constant byte address 0x4 - core index']
  #allocation1 [shape = 'u32[144,128]{1,0:T(1,128)}', space=vmem, size = 0x12000, scoped, tag = 'internal scratch']
  %s0 = inlined_call_operand.vmem [shape: s32[2,8,1], index: 0, kind: input, shape index: {}]
  %s1 = inlined_call_operand.vmem [shape: s32[2,1,8], index: 1, kind: input, shape index: {}]
  %s2 = inlined_call_operand.vmem [shape: f32[2,8,32], index: 2, kind: input, shape index: {}]
  %s3 = inlined_call_operand.hbm [shape: f32[2,32,256], index: 3, kind: output, shape index: {}]
  %s4 = sld [smem:[#allocation0]]
  $region45: #{tpu_custom_call.1} parent=0
    _
  %s6 = ssub.s32 1, %s4
  %s7 = scalar_select 0, %s6, %s4
  $region1: #{tpu_custom_call.1} parent=0
    #allocation2 [shape = 'u8[65536]{0}', space=vmem, size = 0x10000, scoped, tag = 'output window, operand 0']
    #allocation3 [shape = 's32[2]{0}', space=sflag, size = 0x8, scoped, tag = 'scoped memory for tpu_custom_call.1']
    %8 = vsyncpa [#allocation3], 0
    %s9 = scalar_lea.sflag [#allocation3], 1
    %10 = vsyncpa %s9, 0
    loop: start=0, step=1, limit=4
    $region2: #{tpu_custom_call.1} parent=1 // loop_pre_header
      _
    $region3: #{tpu_custom_call.1} parent=1 // loop_header
      %s12 = sphi 0, %s16
      %p13 = scmp.ge.s32.totalorder %s12, 4
      %s19 = sphi 0, %s31
      %s20 = sphi 0, %s27
      %s21 = sphi 0, %s19
      %s22 = sphi 0, %s20
      %s23 = sphi 0, %s21
      %s24 = sphi 0, %s22
      %s34 = sphi 0, %s36
      %s37 = sphi 0, %s34
      %s38 = sphi 0, %s37
      %s54 = sphi 0, %s38
      %s60 = sphi 0, %s62
      %s63 = sphi 0, %s60
      %s64 = sphi 0, %s63
      %s80 = sphi 0, %s64
      %s86 = sphi 0, %s88
      %s89 = sphi 0, %s86
      %s90 = sphi 0, %s89
      %s106 = sphi 0, %s90
      %s114 = sphi 0, %s116
      %s117 = sphi 0, %s114
      %s118 = sphi 0, %s117
      %s134 = sphi 0, %s118
    $region4: #{tpu_custom_call.1} parent=1 // loop_header_branch
      %15 = sbr.rel (%p13) target = $region8
    $region5: #{tpu_custom_call.1} parent=1 // loop_body
      %s17 = ssub.s32 %s12, 1
      %s18 = ssub.s32 %s12, 2
      %s25 = sadd.s32 1, %s20
      %p26 = scmp.ge.s32.totalorder %s25, 1
      %s27 = scalar_select %p26, 0, %s25
      %s28 = sadd.s32 1, %s19
      %s29 = scalar_select %p26, %s28, %s19
      %p30 = scmp.ge.s32.totalorder %s29, 2
      %s31 = scalar_select %p30, 0, %s29
      %s32 = ssub.s32 %s19, %s31
      %p33 = scmp.eq.s32.totalorder %s32, 0
      %s35 = sadd.s32 %s34, 1
      %s36 = scalar_select %p33, %s34, %s35
      %p39 = pneg %p33
      %p40 = scmp.eq.s32.totalorder %s12, 1
      %p41 = por %p39, %p40
      %p42 = scmp.ne.s32.totalorder %s34, %s37
      %p43 = scmp.eq.s32.totalorder %s12, 0
      %p44 = por %p42, %p43
      %p45 = scmp.ne.s32.totalorder %s34, %s37
      %p46 = scmp.eq.s32.totalorder %s17, 1
      %p47 = por %p45, %p46
      %p48 = scmp.ne.s32.totalorder %s37, %s38
      %p49 = scmp.eq.s32.totalorder %s17, 0
      %p50 = por %p48, %p49
      %p51 = scmp.ne.s32.totalorder %s37, %s38
      %p52 = scmp.eq.s32.totalorder %s18, 1
      %p53 = por %p51, %p52
      %p55 = scmp.ne.s32.totalorder %s38, %s54
      %p56 = scmp.eq.s32.totalorder %s18, 0
      %p57 = por %p55, %p56
      %s58 = ssub.s32 %s19, %s31
      %p59 = scmp.eq.s32.totalorder %s58, 0
      %s61 = sadd.s32 %s60, 1
      %s62 = scalar_select %p59, %s60, %s61
      %p65 = pneg %p59
      %p66 = scmp.eq.s32.totalorder %s12, 1
      %p67 = por %p65, %p66
      %p68 = scmp.ne.s32.totalorder %s60, %s63
      %p69 = scmp.eq.s32.totalorder %s12, 0
      %p70 = por %p68, %p69
      %p71 = scmp.ne.s32.totalorder %s60, %s63
      %p72 = scmp.eq.s32.totalorder %s17, 1
      %p73 = por %p71, %p72
      %p74 = scmp.ne.s32.totalorder %s63, %s64
      %p75 = scmp.eq.s32.totalorder %s17, 0
      %p76 = por %p74, %p75
      %p77 = scmp.ne.s32.totalorder %s63, %s64
      %p78 = scmp.eq.s32.totalorder %s18, 1
      %p79 = por %p77, %p78
      %p81 = scmp.ne.s32.totalorder %s64, %s80
      %p82 = scmp.eq.s32.totalorder %s18, 0
      %p83 = por %p81, %p82
      %s84 = ssub.s32 %s19, %s31
      %p85 = scmp.eq.s32.totalorder %s84, 0
      %s87 = sadd.s32 %s86, 1
      %s88 = scalar_select %p85, %s86, %s87
      %p91 = pneg %p85
      %p92 = scmp.eq.s32.totalorder %s12, 1
      %p93 = por %p91, %p92
      %p94 = scmp.ne.s32.totalorder %s86, %s89
      %p95 = scmp.eq.s32.totalorder %s12, 0
      %p96 = por %p94, %p95
      %p97 = scmp.ne.s32.totalorder %s86, %s89
      %p98 = scmp.eq.s32.totalorder %s17, 1
      %p99 = por %p97, %p98
      %p100 = scmp.ne.s32.totalorder %s89, %s90
      %p101 = scmp.eq.s32.totalorder %s17, 0
      %p102 = por %p100, %p101
      %p103 = scmp.ne.s32.totalorder %s89, %s90
      %p104 = scmp.eq.s32.totalorder %s18, 1
      %p105 = por %p103, %p104
      %p107 = scmp.ne.s32.totalorder %s90, %s106
      %p108 = scmp.eq.s32.totalorder %s18, 0
      %p109 = por %p107, %p108
      %s110 = ssub.s32 %s19, %s31
      %s111 = ssub.s32 %s20, %s27
      %s112 = sor.u32 %s110, %s111
      %p113 = scmp.eq.s32.totalorder %s112, 0
      %s115 = sadd.s32 %s114, 1
      %s116 = scalar_select %p113, %s114, %s115
      %p119 = pneg %p113
      %p120 = scmp.eq.s32.totalorder %s12, 1
      %p121 = por %p119, %p120
      %p122 = scmp.ne.s32.totalorder %s114, %s117
      %p123 = scmp.eq.s32.totalorder %s12, 0
      %p124 = por %p122, %p123
      %p125 = scmp.ne.s32.totalorder %s114, %s117
      %p126 = scmp.eq.s32.totalorder %s17, 1
      %p127 = por %p125, %p126
      %p128 = scmp.ne.s32.totalorder %s117, %s118
      %p129 = scmp.eq.s32.totalorder %s17, 0
      %p130 = por %p128, %p129
      %p131 = scmp.ne.s32.totalorder %s117, %s118
      %p132 = scmp.eq.s32.totalorder %s18, 1
      %p133 = por %p131, %p132
      %p135 = scmp.ne.s32.totalorder %s118, %s134
      %p136 = scmp.eq.s32.totalorder %s18, 0
      %p137 = por %p135, %p136
      %p138 = scmp.le.s32.totalorder 1, %s12
      %p139 = scmp.lt.s32.totalorder %s12, 3
      %p140 = pnand %p138, %p139
      %p141 = pneg %p140
      // Predicated region
      $region9: #{tpu_custom_call.1} parent=5 // pred_check
        _
      $region10: #{tpu_custom_call.1} parent=5 // pred_check_branch
        %143 = sbr.rel (%p140) target = $region12
      $region11: #{tpu_custom_call.1} parent=5 // pred_region
        %s144 = ssub.s32 %s12, 1
      $region12: #{tpu_custom_call.1} parent=5 // pred_fallthru
        _
      %p145 = scmp.lt.s32.totalorder %s12, 2
      // Predicated region
      $region13: #{tpu_custom_call.1} parent=5 // pred_check
        %p146 = pneg %p145
      $region14: #{tpu_custom_call.1} parent=5 // pred_check_branch
        %148 = sbr.rel (%p146) target = $region16
      $region15: #{tpu_custom_call.1} parent=5 // pred_region
        // Predicated region
        $region17: #{tpu_custom_call.1} parent=15 // pred_check
          %p149 = pneg %p44
        $region18: #{tpu_custom_call.1} parent=15 // pred_check_branch
          %151 = sbr.rel (%p149) target = $region20
        $region19: #{tpu_custom_call.1} parent=15 // pred_region
          %p152 = scmp.lt.s32.totalorder %s19, 1
          %s153 = scalar_select %p152, %s19, 1
          %s154 = smul.addr %s153, 8
          %s155 = scalar_lea.vmem %s0, %s154
        $region20: #{tpu_custom_call.1} parent=15 // pred_fallthru
          _
        // Predicated region
        $region21: #{tpu_custom_call.1} parent=15 // pred_check
          %p156 = pneg %p70
        $region22: #{tpu_custom_call.1} parent=15 // pred_check_branch
          %158 = sbr.rel (%p156) target = $region24
        $region23: #{tpu_custom_call.1} parent=15 // pred_region
          %p159 = scmp.lt.s32.totalorder %s19, 1
          %s160 = scalar_select %p159, %s19, 1
          %s161 = scalar_lea.vmem %s1, %s160
        $region24: #{tpu_custom_call.1} parent=15 // pred_fallthru
          _
        // Predicated region
        $region25: #{tpu_custom_call.1} parent=15 // pred_check
          %p162 = pneg %p96
        $region26: #{tpu_custom_call.1} parent=15 // pred_check_branch
          %164 = sbr.rel (%p162) target = $region28
        $region27: #{tpu_custom_call.1} parent=15 // pred_region
          %p165 = scmp.lt.s32.totalorder %s19, 1
          %s166 = scalar_select %p165, %s19, 1
          %s167 = smul.addr %s166, 8
          %s168 = scalar_lea.vmem %s2, %s167
        $region28: #{tpu_custom_call.1} parent=15 // pred_fallthru
          _
      $region16: #{tpu_custom_call.1} parent=5 // pred_fallthru
        _
      %p169 = scmp.le.s32.totalorder 1, %s12
      %p170 = scmp.lt.s32.totalorder %s12, 3
      %p171 = pnand %p169, %p170
      %p172 = pneg %p171
      // Predicated region
      $region29: #{tpu_custom_call.1} parent=5 // pred_check
        _
      $region30: #{tpu_custom_call.1} parent=5 // pred_check_branch
        %174 = sbr.rel (%p171) target = $region32
      $region31: #{tpu_custom_call.1} parent=5 // pred_region
        %s175 = ssub.s32 %s12, 1
        %p176 = scmp.lt.s32.totalorder %s21, 1
        %s177 = scalar_select %p176, %s21, 1
        %s178 = smul.addr %s177, 8
        %s179 = scalar_lea.vmem %s0, %s178
        %p180 = pneg %p50
        %p181 = pneg %p47
        %p182 = scmp.lt.s32.totalorder %s21, 1
        %s183 = scalar_select %p182, %s21, 1
        %s184 = scalar_lea.vmem %s1, %s183
        %p185 = pneg %p76
        %p186 = pneg %p73
        %p187 = scmp.lt.s32.totalorder %s21, 1
        %s188 = scalar_select %p187, %s21, 1
        %s189 = smul.addr %s188, 8
        %s190 = scalar_lea.vmem %s2, %s189
        %p191 = pneg %p102
        %p192 = pneg %p99
        %p193 = pneg %p130
        %p194 = pneg %p127
        %s195 = sand.u32 %s117, 1
        %s196 = scalar_lea.sflag [#allocation3], %s195
        %s197 = sand.u32 %s117, 1
        %s198 = smul.addr %s197, 64
        %s199 = scalar_lea.vmem [#allocation2], %s198
        %p200 = scmp.lt.s32.totalorder %s21, 1
        %s201 = scalar_select %p200, %s21, 1
        %s202 = smul.addr %s201, 8
        %s203 = scalar_lea.vmem %s0, %s202
        %p204 = scmp.lt.s32.totalorder %s21, 1
        %s205 = scalar_select %p204, %s21, 1
        %s206 = scalar_lea.vmem %s1, %s205
        %p207 = scmp.lt.s32.totalorder %s21, 1
        %s208 = scalar_select %p207, %s21, 1
        %s209 = smul.addr %s208, 8
        %s210 = scalar_lea.vmem %s2, %s209
        %s211 = smul.u32 2, %s22
        %v212 = vld [vmem:[%s203] sm:$0xff]
        %v213 = vlaneseq
        %v214 = vand.u32 %v213, 127
        %v215 = vadd.s32 %v214, 128
        %s216 = smul.u32 %s22, 256
        %v217 = vstv %s216
        %v218 = vadd.s32 %v214, %v217
        %v219 = vadd.s32 %v215, %v217
        %220 = vset.pattern.permute.xlu0 0
        %221 = vperm.xlu0 %220, %v212
        %v222 = vpop.permute.xlu0 %221
        %vm223 = vcmp.eq.s32.totalorder %v222, %v218
        %vm224 = vcmp.eq.s32.totalorder %v222, %v219
        %v225 = vsel %vm223, 1, 0
        %v226 = vsel %vm224, 1, 0
        %v227 = vcvt.s32.f32 %v225
        %v228 = vcvt.s32.f32 %v226
        %v229 = vld [vmem:[%s210] sm:$0xff]
        %230 = vxpose.xlu0.b32.start [1/16] %v229, 128
        %231 = vxpose.xlu0.b32.cont [2/16] 0.0, 128
        %232 = vxpose.xlu0.b32.cont [3/16] 0.0, 128
        %233 = vxpose.xlu0.b32.cont [4/16] 0.0, 128
        %234 = vxpose.xlu0.b32.cont [5/16] 0.0, 128
        %235 = vxpose.xlu0.b32.cont [6/16] 0.0, 128
        %236 = vxpose.xlu0.b32.cont [7/16] 0.0, 128
        %237 = vxpose.xlu0.b32.cont [8/16] 0.0, 128
        %238 = vxpose.xlu0.b32.cont [9/16] 0.0, 128
        %239 = vxpose.xlu0.b32.cont [10/16] 0.0, 128
        %240 = vxpose.xlu0.b32.cont [11/16] 0.0, 128
        %241 = vxpose.xlu0.b32.cont [12/16] 0.0, 128
        %242 = vxpose.xlu0.b32.cont [13/16] 0.0, 128
        %243 = vxpose.xlu0.b32.cont [14/16] 0.0, 128
        %244 = vxpose.xlu0.b32.cont [15/16] 0.0, 128
        %245 = vxpose.xlu0.b32.end [16/16] 0.0, 128
        %v246 = vpop.trf.xlu0
        %v247 = vpop.trf.xlu0
        %v248 = vpop.trf.xlu0
        %v249 = vpop.trf.xlu0
        %v250 = vpop.trf.xlu0
        %v251 = vpop.trf.xlu0
        %v252 = vpop.trf.xlu0
        %v253 = vpop.trf.xlu0
        %v254 = vpop.trf.xlu0
        %v255 = vpop.trf.xlu0
        %v256 = vpop.trf.xlu0
        %v257 = vpop.trf.xlu0
        %v258 = vpop.trf.xlu0
        %v259 = vpop.trf.xlu0
        %v260 = vpop.trf.xlu0
        %v261 = vpop.trf.xlu0
        %vm262 = vcmask 64512
        %v264 = vsel %vm262, %v246, 0
        %v267 = vsel %vm262, %v247, 0
        %v270 = vsel %vm262, %v248, 0
        %v273 = vsel %vm262, %v249, 0
        %275 = vmatprep.subr.mxu0 0.0
        %276 = vmatpush1.msra.mxu0 0.0
        %277 = vmatprep.subr.mxu0 0.0
        %278 = vmatpush1.msra.mxu0 0.0
        %279 = vmatprep.subr.mxu0 0.0
        %280 = vmatpush1.msra.mxu0 0.0
        %281 = vmatprep.subr.mxu0 0.0
        %282 = vmatpush1.msra.mxu0 0.0
        %283 = vmatprep.subr.mxu0 0.0
        %284 = vmatpush1.msra.mxu0 0.0
        %285 = vmatprep.subr.mxu0 0.0
        %286 = vmatpush1.msra.mxu0 0.0
        %287 = vmatprep.subr.mxu0 0.0
        %288 = vmatpush1.msra.mxu0 0.0
        %289 = vmatprep.subr.mxu0 0.0
        %290 = vmatpush1.msra.mxu0 0.0
        %291 = vmatprep.subr.mxu0 0.0
        %292 = vmatpush1.msra.mxu0 0.0
        %293 = vmatprep.subr.mxu0 0.0
        %294 = vmatpush1.msra.mxu0 0.0
        %295 = vmatprep.subr.mxu0 0.0
        %296 = vmatpush1.msra.mxu0 0.0
        %297 = vmatprep.subr.mxu0 0.0
        %298 = vmatpush1.msra.mxu0 0.0
        %299 = vmatprep.subr.mxu0 0.0
        %300 = vmatpush1.msra.mxu0 0.0
        %301 = vmatprep.subr.mxu0 0.0
        %302 = vmatpush1.msra.mxu0 0.0
        %303 = vmatprep.subr.mxu0 0.0
        %304 = vmatpush1.msra.mxu0 0.0
        %v305 = vand.u32 %v228, 4294901760
        %306 = vmatprep.subr.mxu0 %v305
        %v307 = vand.u32 %v227, 4294901760
        %308 = vmatpush1.msra.mxu0 %v307
        %309 = vmatprep.subr.mxu0 0.0
        %310 = vmatpush2.msra.mxu0 0.0
        %311 = vmatprep.subr.mxu0 0.0
        %312 = vmatpush2.msra.mxu0 0.0
        %313 = vmatprep.subr.mxu0 0.0
        %314 = vmatpush2.msra.mxu0 0.0
        %315 = vmatprep.subr.mxu0 0.0
        %316 = vmatpush2.msra.mxu0 0.0
        %317 = vmatprep.subr.mxu0 0.0
        %318 = vmatpush2.msra.mxu0 0.0
        %319 = vmatprep.subr.mxu0 0.0
        %320 = vmatpush2.msra.mxu0 0.0
        %321 = vmatprep.subr.mxu0 0.0
        %322 = vmatpush2.msra.mxu0 0.0
        %323 = vmatprep.subr.mxu0 0.0
        %324 = vmatpush2.msra.mxu0 0.0
        %325 = vmatprep.subr.mxu0 0.0
        %326 = vmatpush2.msra.mxu0 0.0
        %327 = vmatprep.subr.mxu0 0.0
        %328 = vmatpush2.msra.mxu0 0.0
        %329 = vmatprep.subr.mxu0 0.0
        %330 = vmatpush2.msra.mxu0 0.0
        %331 = vmatprep.subr.mxu0 0.0
        %332 = vmatpush2.msra.mxu0 0.0
        %333 = vmatprep.subr.mxu0 0.0
        %334 = vmatpush2.msra.mxu0 0.0
        %335 = vmatprep.subr.mxu0 0.0
        %336 = vmatpush2.msra.mxu0 0.0
        %337 = vmatprep.subr.mxu0 0.0
        %338 = vmatpush2.msra.mxu0 0.0
        %339 = vmatprep.subr.mxu0 0.0
        %340 = vmatpush2.msra.mxu0 0.0
        %341 = vmatprep.mubr.f32.mxu0 0.0
        %v342 = vand.u32 %v264, 4294901760
        %v343 = vsub.f32 %v264, %v342
        %v344 = vand.u32 %v343, 4294901760
        %v345 = vsub.f32 %v343, %v344
        %v346 = vand.u32 %v345, 4294901760
        %347 = vmatmul.mubr.f32.gmra.mxu0 %v346
        %v348 = vpop.f32.mrf.mxu0
        %v349 = vadd.f32 0.0, %v348
        %v350 = vpop.f32.mrf.mxu0
        %v351 = vadd.f32 0.0, %v350
        %352 = vmatprep.mubr.f32.mxu0 0.0
        %v353 = vand.u32 %v267, 4294901760
        %v354 = vsub.f32 %v267, %v353
        %v355 = vand.u32 %v354, 4294901760
        %v356 = vsub.f32 %v354, %v355
        %v357 = vand.u32 %v356, 4294901760
        %358 = vmatmul.mubr.f32.gmra.mxu0 %v357
        %v359 = vpop.f32.mrf.mxu0
        %v360 = vadd.f32 0.0, %v359
        %v361 = vpop.f32.mrf.mxu0
        %v362 = vadd.f32 0.0, %v361
        %363 = vmatprep.mubr.f32.mxu0 0.0
        %v364 = vand.u32 %v270, 4294901760
        %v365 = vsub.f32 %v270, %v364
        %v366 = vand.u32 %v365, 4294901760
        %v367 = vsub.f32 %v365, %v366
        %v368 = vand.u32 %v367, 4294901760
        %369 = vmatmul.mubr.f32.gmra.mxu0 %v368
        %v370 = vpop.f32.mrf.mxu0
        %v371 = vadd.f32 0.0, %v370
        %v372 = vpop.f32.mrf.mxu0
        %v373 = vadd.f32 0.0, %v372
        %374 = vmatprep.mubr.f32.mxu0 0.0
        %v375 = vand.u32 %v273, 4294901760
        %v376 = vsub.f32 %v273, %v375
        %v377 = vand.u32 %v376, 4294901760
        %v378 = vsub.f32 %v376, %v377
        %v379 = vand.u32 %v378, 4294901760
        %380 = vmatmul.mubr.f32.gmra.mxu0 %v379
        %v381 = vpop.f32.mrf.mxu0
        %v382 = vadd.f32 0.0, %v381
        %v383 = vpop.f32.mrf.mxu0
        %v384 = vadd.f32 0.0, %v383
        %385 = vdwg.mxu0
        %386 = vmatprep.subr.mxu0 0.0
        %387 = vmatpush1.msra.mxu0 0.0
        %388 = vmatprep.subr.mxu0 0.0
        %389 = vmatpush1.msra.mxu0 0.0
        %390 = vmatprep.subr.mxu0 0.0
        %391 = vmatpush1.msra.mxu0 0.0
        %392 = vmatprep.subr.mxu0 0.0
        %393 = vmatpush1.msra.mxu0 0.0
        %394 = vmatprep.subr.mxu0 0.0
        %395 = vmatpush1.msra.mxu0 0.0
        %396 = vmatprep.subr.mxu0 0.0
        %397 = vmatpush1.msra.mxu0 0.0
        %398 = vmatprep.subr.mxu0 0.0
        %399 = vmatpush1.msra.mxu0 0.0
        %400 = vmatprep.subr.mxu0 0.0
        %401 = vmatpush1.msra.mxu0 0.0
        %402 = vmatprep.subr.mxu0 0.0
        %403 = vmatpush1.msra.mxu0 0.0
        %404 = vmatprep.subr.mxu0 0.0
        %405 = vmatpush1.msra.mxu0 0.0
        %406 = vmatprep.subr.mxu0 0.0
        %407 = vmatpush1.msra.mxu0 0.0
        %408 = vmatprep.subr.mxu0 0.0
        %409 = vmatpush1.msra.mxu0 0.0
        %410 = vmatprep.subr.mxu0 0.0
        %411 = vmatpush1.msra.mxu0 0.0
        %412 = vmatprep.subr.mxu0 0.0
        %413 = vmatpush1.msra.mxu0 0.0
        %414 = vmatprep.subr.mxu0 0.0
        %415 = vmatpush1.msra.mxu0 0.0
        %v416 = vand.u32 %v228, 4294901760
        %v417 = vsub.f32 %v228, %v416
        %v418 = vand.u32 %v417, 4294901760
        %v419 = vsub.f32 %v417, %v418
        %v420 = vand.u32 %v419, 4294901760
        %421 = vmatprep.subr.mxu0 %v420
        %v422 = vand.u32 %v227, 4294901760
        %v423 = vsub.f32 %v227, %v422
        %v424 = vand.u32 %v423, 4294901760
        %v425 = vsub.f32 %v423, %v424
        %v426 = vand.u32 %v425, 4294901760
        %427 = vmatpush1.msra.mxu0 %v426
        %428 = vmatprep.subr.mxu0 0.0
        %429 = vmatpush2.msra.mxu0 0.0
        %430 = vmatprep.subr.mxu0 0.0
        %431 = vmatpush2.msra.mxu0 0.0
        %432 = vmatprep.subr.mxu0 0.0
        %433 = vmatpush2.msra.mxu0 0.0
        %434 = vmatprep.subr.mxu0 0.0
        %435 = vmatpush2.msra.mxu0 0.0
        %436 = vmatprep.subr.mxu0 0.0
        %437 = vmatpush2.msra.mxu0 0.0
        %438 = vmatprep.subr.mxu0 0.0
        %439 = vmatpush2.msra.mxu0 0.0
        %440 = vmatprep.subr.mxu0 0.0
        %441 = vmatpush2.msra.mxu0 0.0
        %442 = vmatprep.subr.mxu0 0.0
        %443 = vmatpush2.msra.mxu0 0.0
        %444 = vmatprep.subr.mxu0 0.0
        %445 = vmatpush2.msra.mxu0 0.0
        %446 = vmatprep.subr.mxu0 0.0
        %447 = vmatpush2.msra.mxu0 0.0
        %448 = vmatprep.subr.mxu0 0.0
        %449 = vmatpush2.msra.mxu0 0.0
        %450 = vmatprep.subr.mxu0 0.0
        %451 = vmatpush2.msra.mxu0 0.0
        %452 = vmatprep.subr.mxu0 0.0
        %453 = vmatpush2.msra.mxu0 0.0
        %454 = vmatprep.subr.mxu0 0.0
        %455 = vmatpush2.msra.mxu0 0.0
        %456 = vmatprep.subr.mxu0 0.0
        %457 = vmatpush2.msra.mxu0 0.0
        %458 = vmatprep.subr.mxu0 0.0
        %459 = vmatpush2.msra.mxu0 0.0
        %460 = vmatprep.mubr.f32.mxu0 0.0
        %v461 = vand.u32 %v264, 4294901760
        %462 = vmatmul.mubr.f32.gmra.mxu0 %v461
        %v463 = vpop.f32.mrf.mxu0
        %v464 = vadd.f32 %v349, %v463
        %v465 = vpop.f32.mrf.mxu0
        %v466 = vadd.f32 %v351, %v465
        %467 = vmatprep.mubr.f32.mxu0 0.0
        %v468 = vand.u32 %v267, 4294901760
        %469 = vmatmul.mubr.f32.gmra.mxu0 %v468
        %v470 = vpop.f32.mrf.mxu0
        %v471 = vadd.f32 %v360, %v470
        %v472 = vpop.f32.mrf.mxu0
        %v473 = vadd.f32 %v362, %v472
        %474 = vmatprep.mubr.f32.mxu0 0.0
        %v475 = vand.u32 %v270, 4294901760
        %476 = vmatmul.mubr.f32.gmra.mxu0 %v475
        %v477 = vpop.f32.mrf.mxu0
        %v478 = vadd.f32 %v371, %v477
        %v479 = vpop.f32.mrf.mxu0
        %v480 = vadd.f32 %v373, %v479
        %481 = vmatprep.mubr.f32.mxu0 0.0
        %v482 = vand.u32 %v273, 4294901760
        %483 = vmatmul.mubr.f32.gmra.mxu0 %v482
        %v484 = vpop.f32.mrf.mxu0
        %v485 = vadd.f32 %v382, %v484
        %v486 = vpop.f32.mrf.mxu0
        %v487 = vadd.f32 %v384, %v486
        %488 = vdwg.mxu0
        %489 = vmatprep.subr.mxu0 0.0
        %490 = vmatpush1.msra.mxu0 0.0
        %491 = vmatprep.subr.mxu0 0.0
        %492 = vmatpush1.msra.mxu0 0.0
        %493 = vmatprep.subr.mxu0 0.0
        %494 = vmatpush1.msra.mxu0 0.0
        %495 = vmatprep.subr.mxu0 0.0
        %496 = vmatpush1.msra.mxu0 0.0
        %497 = vmatprep.subr.mxu0 0.0
        %498 = vmatpush1.msra.mxu0 0.0
        %499 = vmatprep.subr.mxu0 0.0
        %500 = vmatpush1.msra.mxu0 0.0
        %501 = vmatprep.subr.mxu0 0.0
        %502 = vmatpush1.msra.mxu0 0.0
        %503 = vmatprep.subr.mxu0 0.0
        %504 = vmatpush1.msra.mxu0 0.0
        %505 = vmatprep.subr.mxu0 0.0
        %506 = vmatpush1.msra.mxu0 0.0
        %507 = vmatprep.subr.mxu0 0.0
        %508 = vmatpush1.msra.mxu0 0.0
        %509 = vmatprep.subr.mxu0 0.0
        %510 = vmatpush1.msra.mxu0 0.0
        %511 = vmatprep.subr.mxu0 0.0
        %512 = vmatpush1.msra.mxu0 0.0
        %513 = vmatprep.subr.mxu0 0.0
        %514 = vmatpush1.msra.mxu0 0.0
        %515 = vmatprep.subr.mxu0 0.0
        %516 = vmatpush1.msra.mxu0 0.0
        %517 = vmatprep.subr.mxu0 0.0
        %518 = vmatpush1.msra.mxu0 0.0
        %v519 = vand.u32 %v228, 4294901760
        %v520 = vsub.f32 %v228, %v519
        %521 = vmatprep.subr.mxu0 %v520
        %v522 = vand.u32 %v227, 4294901760
        %v523 = vsub.f32 %v227, %v522
        %524 = vmatpush1.msra.mxu0 %v523
        %525 = vmatprep.subr.mxu0 0.0
        %526 = vmatpush2.msra.mxu0 0.0
        %527 = vmatprep.subr.mxu0 0.0
        %528 = vmatpush2.msra.mxu0 0.0
        %529 = vmatprep.subr.mxu0 0.0
        %530 = vmatpush2.msra.mxu0 0.0
        %531 = vmatprep.subr.mxu0 0.0
        %532 = vmatpush2.msra.mxu0 0.0
        %533 = vmatprep.subr.mxu0 0.0
        %534 = vmatpush2.msra.mxu0 0.0
        %535 = vmatprep.subr.mxu0 0.0
        %536 = vmatpush2.msra.mxu0 0.0
        %537 = vmatprep.subr.mxu0 0.0
        %538 = vmatpush2.msra.mxu0 0.0
        %539 = vmatprep.subr.mxu0 0.0
        %540 = vmatpush2.msra.mxu0 0.0
        %541 = vmatprep.subr.mxu0 0.0
        %542 = vmatpush2.msra.mxu0 0.0
        %543 = vmatprep.subr.mxu0 0.0
        %544 = vmatpush2.msra.mxu0 0.0
        %545 = vmatprep.subr.mxu0 0.0
        %546 = vmatpush2.msra.mxu0 0.0
        %547 = vmatprep.subr.mxu0 0.0
        %548 = vmatpush2.msra.mxu0 0.0
        %549 = vmatprep.subr.mxu0 0.0
        %550 = vmatpush2.msra.mxu0 0.0
        %551 = vmatprep.subr.mxu0 0.0
        %552 = vmatpush2.msra.mxu0 0.0
        %553 = vmatprep.subr.mxu0 0.0
        %554 = vmatpush2.msra.mxu0 0.0
        %555 = vmatprep.subr.mxu0 0.0
        %556 = vmatpush2.msra.mxu0 0.0
        %557 = vmatprep.mubr.f32.mxu0 0.0
        %v558 = vand.u32 %v264, 4294901760
        %v559 = vsub.f32 %v264, %v558
        %560 = vmatmul.mubr.f32.gmra.mxu0 %v559
        %v561 = vpop.f32.mrf.mxu0
        %v562 = vadd.f32 %v464, %v561
        %v563 = vpop.f32.mrf.mxu0
        %v564 = vadd.f32 %v466, %v563
        %565 = vmatprep.mubr.f32.mxu0 0.0
        %v566 = vand.u32 %v267, 4294901760
        %v567 = vsub.f32 %v267, %v566
        %568 = vmatmul.mubr.f32.gmra.mxu0 %v567
        %v569 = vpop.f32.mrf.mxu0
        %v570 = vadd.f32 %v471, %v569
        %v571 = vpop.f32.mrf.mxu0
        %v572 = vadd.f32 %v473, %v571
        %573 = vmatprep.mubr.f32.mxu0 0.0
        %v574 = vand.u32 %v270, 4294901760
        %v575 = vsub.f32 %v270, %v574
        %576 = vmatmul.mubr.f32.gmra.mxu0 %v575
        %v577 = vpop.f32.mrf.mxu0
        %v578 = vadd.f32 %v478, %v577
        %v579 = vpop.f32.mrf.mxu0
        %v580 = vadd.f32 %v480, %v579
        %581 = vmatprep.mubr.f32.mxu0 0.0
        %v582 = vand.u32 %v273, 4294901760
        %v583 = vsub.f32 %v273, %v582
        %584 = vmatmul.mubr.f32.gmra.mxu0 %v583
        %v585 = vpop.f32.mrf.mxu0
        %v586 = vadd.f32 %v485, %v585
        %v587 = vpop.f32.mrf.mxu0
        %v588 = vadd.f32 %v487, %v587
        %589 = vdwg.mxu0
        %590 = vmatprep.subr.mxu0 0.0
        %591 = vmatpush1.msra.mxu0 0.0
        %592 = vmatprep.subr.mxu0 0.0
        %593 = vmatpush1.msra.mxu0 0.0
        %594 = vmatprep.subr.mxu0 0.0
        %595 = vmatpush1.msra.mxu0 0.0
        %596 = vmatprep.subr.mxu0 0.0
        %597 = vmatpush1.msra.mxu0 0.0
        %598 = vmatprep.subr.mxu0 0.0
        %599 = vmatpush1.msra.mxu0 0.0
        %600 = vmatprep.subr.mxu0 0.0
        %601 = vmatpush1.msra.mxu0 0.0
        %602 = vmatprep.subr.mxu0 0.0
        %603 = vmatpush1.msra.mxu0 0.0
        %604 = vmatprep.subr.mxu0 0.0
        %605 = vmatpush1.msra.mxu0 0.0
        %606 = vmatprep.subr.mxu0 0.0
        %607 = vmatpush1.msra.mxu0 0.0
        %608 = vmatprep.subr.mxu0 0.0
        %609 = vmatpush1.msra.mxu0 0.0
        %610 = vmatprep.subr.mxu0 0.0
        %611 = vmatpush1.msra.mxu0 0.0
        %612 = vmatprep.subr.mxu0 0.0
        %613 = vmatpush1.msra.mxu0 0.0
        %614 = vmatprep.subr.mxu0 0.0
        %615 = vmatpush1.msra.mxu0 0.0
        %616 = vmatprep.subr.mxu0 0.0
        %617 = vmatpush1.msra.mxu0 0.0
        %618 = vmatprep.subr.mxu0 0.0
        %619 = vmatpush1.msra.mxu0 0.0
        %v620 = vand.u32 %v228, 4294901760
        %621 = vmatprep.subr.mxu0 %v620
        %v622 = vand.u32 %v227, 4294901760
        %623 = vmatpush1.msra.mxu0 %v622
        %624 = vmatprep.subr.mxu0 0.0
        %625 = vmatpush2.msra.mxu0 0.0
        %626 = vmatprep.subr.mxu0 0.0
        %627 = vmatpush2.msra.mxu0 0.0
        %628 = vmatprep.subr.mxu0 0.0
        %629 = vmatpush2.msra.mxu0 0.0
        %630 = vmatprep.subr.mxu0 0.0
        %631 = vmatpush2.msra.mxu0 0.0
        %632 = vmatprep.subr.mxu0 0.0
        %633 = vmatpush2.msra.mxu0 0.0
        %634 = vmatprep.subr.mxu0 0.0
        %635 = vmatpush2.msra.mxu0 0.0
        %636 = vmatprep.subr.mxu0 0.0
        %637 = vmatpush2.msra.mxu0 0.0
        %638 = vmatprep.subr.mxu0 0.0
        %639 = vmatpush2.msra.mxu0 0.0
        %640 = vmatprep.subr.mxu0 0.0
        %641 = vmatpush2.msra.mxu0 0.0
        %642 = vmatprep.subr.mxu0 0.0
        %643 = vmatpush2.msra.mxu0 0.0
        %644 = vmatprep.subr.mxu0 0.0
        %645 = vmatpush2.msra.mxu0 0.0
        %646 = vmatprep.subr.mxu0 0.0
        %647 = vmatpush2.msra.mxu0 0.0
        %648 = vmatprep.subr.mxu0 0.0
        %649 = vmatpush2.msra.mxu0 0.0
        %650 = vmatprep.subr.mxu0 0.0
        %651 = vmatpush2.msra.mxu0 0.0
        %652 = vmatprep.subr.mxu0 0.0
        %653 = vmatpush2.msra.mxu0 0.0
        %654 = vmatprep.subr.mxu0 0.0
        %655 = vmatpush2.msra.mxu0 0.0
        %656 = vmatprep.mubr.f32.mxu0 0.0
        %v657 = vand.u32 %v264, 4294901760
        %v658 = vsub.f32 %v264, %v657
        %v659 = vand.u32 %v658, 4294901760
        %660 = vmatmul.mubr.f32.gmra.mxu0 %v659
        %v661 = vpop.f32.mrf.mxu0
        %v662 = vadd.f32 %v562, %v661
        %v663 = vpop.f32.mrf.mxu0
        %v664 = vadd.f32 %v564, %v663
        %665 = vmatprep.mubr.f32.mxu0 0.0
        %v666 = vand.u32 %v267, 4294901760
        %v667 = vsub.f32 %v267, %v666
        %v668 = vand.u32 %v667, 4294901760
        %669 = vmatmul.mubr.f32.gmra.mxu0 %v668
        %v670 = vpop.f32.mrf.mxu0
        %v671 = vadd.f32 %v570, %v670
        %v672 = vpop.f32.mrf.mxu0
        %v673 = vadd.f32 %v572, %v672
        %674 = vmatprep.mubr.f32.mxu0 0.0
        %v675 = vand.u32 %v270, 4294901760
        %v676 = vsub.f32 %v270, %v675
        %v677 = vand.u32 %v676, 4294901760
        %678 = vmatmul.mubr.f32.gmra.mxu0 %v677
        %v679 = vpop.f32.mrf.mxu0
        %v680 = vadd.f32 %v578, %v679
        %v681 = vpop.f32.mrf.mxu0
        %v682 = vadd.f32 %v580, %v681
        %683 = vmatprep.mubr.f32.mxu0 0.0
        %v684 = vand.u32 %v273, 4294901760
        %v685 = vsub.f32 %v273, %v684
        %v686 = vand.u32 %v685, 4294901760
        %687 = vmatmul.mubr.f32.gmra.mxu0 %v686
        %v688 = vpop.f32.mrf.mxu0
        %v689 = vadd.f32 %v586, %v688
        %v690 = vpop.f32.mrf.mxu0
        %v691 = vadd.f32 %v588, %v690
        %692 = vdwg.mxu0
        %693 = vmatprep.subr.mxu0 0.0
        %694 = vmatpush1.msra.mxu0 0.0
        %695 = vmatprep.subr.mxu0 0.0
        %696 = vmatpush1.msra.mxu0 0.0
        %697 = vmatprep.subr.mxu0 0.0
        %698 = vmatpush1.msra.mxu0 0.0
        %699 = vmatprep.subr.mxu0 0.0
        %700 = vmatpush1.msra.mxu0 0.0
        %701 = vmatprep.subr.mxu0 0.0
        %702 = vmatpush1.msra.mxu0 0.0
        %703 = vmatprep.subr.mxu0 0.0
        %704 = vmatpush1.msra.mxu0 0.0
        %705 = vmatprep.subr.mxu0 0.0
        %706 = vmatpush1.msra.mxu0 0.0
        %707 = vmatprep.subr.mxu0 0.0
        %708 = vmatpush1.msra.mxu0 0.0
        %709 = vmatprep.subr.mxu0 0.0
        %710 = vmatpush1.msra.mxu0 0.0
        %711 = vmatprep.subr.mxu0 0.0
        %712 = vmatpush1.msra.mxu0 0.0
        %713 = vmatprep.subr.mxu0 0.0
        %714 = vmatpush1.msra.mxu0 0.0
        %715 = vmatprep.subr.mxu0 0.0
        %716 = vmatpush1.msra.mxu0 0.0
        %717 = vmatprep.subr.mxu0 0.0
        %718 = vmatpush1.msra.mxu0 0.0
        %719 = vmatprep.subr.mxu0 0.0
        %720 = vmatpush1.msra.mxu0 0.0
        %721 = vmatprep.subr.mxu0 0.0
        %722 = vmatpush1.msra.mxu0 0.0
        %v723 = vand.u32 %v228, 4294901760
        %v724 = vsub.f32 %v228, %v723
        %v725 = vand.u32 %v724, 4294901760
        %726 = vmatprep.subr.mxu0 %v725
        %v727 = vand.u32 %v227, 4294901760
        %v728 = vsub.f32 %v227, %v727
        %v729 = vand.u32 %v728, 4294901760
        %730 = vmatpush1.msra.mxu0 %v729
        %731 = vmatprep.subr.mxu0 0.0
        %732 = vmatpush2.msra.mxu0 0.0
        %733 = vmatprep.subr.mxu0 0.0
        %734 = vmatpush2.msra.mxu0 0.0
        %735 = vmatprep.subr.mxu0 0.0
        %736 = vmatpush2.msra.mxu0 0.0
        %737 = vmatprep.subr.mxu0 0.0
        %738 = vmatpush2.msra.mxu0 0.0
        %739 = vmatprep.subr.mxu0 0.0
        %740 = vmatpush2.msra.mxu0 0.0
        %741 = vmatprep.subr.mxu0 0.0
        %742 = vmatpush2.msra.mxu0 0.0
        %743 = vmatprep.subr.mxu0 0.0
        %744 = vmatpush2.msra.mxu0 0.0
        %745 = vmatprep.subr.mxu0 0.0
        %746 = vmatpush2.msra.mxu0 0.0
        %747 = vmatprep.subr.mxu0 0.0
        %748 = vmatpush2.msra.mxu0 0.0
        %749 = vmatprep.subr.mxu0 0.0
        %750 = vmatpush2.msra.mxu0 0.0
        %751 = vmatprep.subr.mxu0 0.0
        %752 = vmatpush2.msra.mxu0 0.0
        %753 = vmatprep.subr.mxu0 0.0
        %754 = vmatpush2.msra.mxu0 0.0
        %755 = vmatprep.subr.mxu0 0.0
        %756 = vmatpush2.msra.mxu0 0.0
        %757 = vmatprep.subr.mxu0 0.0
        %758 = vmatpush2.msra.mxu0 0.0
        %759 = vmatprep.subr.mxu0 0.0
        %760 = vmatpush2.msra.mxu0 0.0
        %761 = vmatprep.subr.mxu0 0.0
        %762 = vmatpush2.msra.mxu0 0.0
        %763 = vmatprep.mubr.f32.mxu0 0.0
        %v764 = vand.u32 %v264, 4294901760
        %765 = vmatmul.mubr.f32.gmra.mxu0 %v764
        %v766 = vpop.f32.mrf.mxu0
        %v767 = vadd.f32 %v662, %v766
        %v768 = vpop.f32.mrf.mxu0
        %v769 = vadd.f32 %v664, %v768
        %770 = vmatprep.mubr.f32.mxu0 0.0
        %v771 = vand.u32 %v267, 4294901760
        %772 = vmatmul.mubr.f32.gmra.mxu0 %v771
        %v773 = vpop.f32.mrf.mxu0
        %v774 = vadd.f32 %v671, %v773
        %v775 = vpop.f32.mrf.mxu0
        %v776 = vadd.f32 %v673, %v775
        %777 = vmatprep.mubr.f32.mxu0 0.0
        %v778 = vand.u32 %v270, 4294901760
        %779 = vmatmul.mubr.f32.gmra.mxu0 %v778
        %v780 = vpop.f32.mrf.mxu0
        %v781 = vadd.f32 %v680, %v780
        %v782 = vpop.f32.mrf.mxu0
        %v783 = vadd.f32 %v682, %v782
        %784 = vmatprep.mubr.f32.mxu0 0.0
        %v785 = vand.u32 %v273, 4294901760
        %786 = vmatmul.mubr.f32.gmra.mxu0 %v785
        %v787 = vpop.f32.mrf.mxu0
        %v788 = vadd.f32 %v689, %v787
        %v789 = vpop.f32.mrf.mxu0
        %v790 = vadd.f32 %v691, %v789
        %791 = vdwg.mxu0
        %792 = vmatprep.subr.mxu0 0.0
        %793 = vmatpush1.msra.mxu0 0.0
        %794 = vmatprep.subr.mxu0 0.0
        %795 = vmatpush1.msra.mxu0 0.0
        %796 = vmatprep.subr.mxu0 0.0
        %797 = vmatpush1.msra.mxu0 0.0
        %798 = vmatprep.subr.mxu0 0.0
        %799 = vmatpush1.msra.mxu0 0.0
        %800 = vmatprep.subr.mxu0 0.0
        %801 = vmatpush1.msra.mxu0 0.0
        %802 = vmatprep.subr.mxu0 0.0
        %803 = vmatpush1.msra.mxu0 0.0
        %804 = vmatprep.subr.mxu0 0.0
        %805 = vmatpush1.msra.mxu0 0.0
        %806 = vmatprep.subr.mxu0 0.0
        %807 = vmatpush1.msra.mxu0 0.0
        %808 = vmatprep.subr.mxu0 0.0
        %809 = vmatpush1.msra.mxu0 0.0
        %810 = vmatprep.subr.mxu0 0.0
        %811 = vmatpush1.msra.mxu0 0.0
        %812 = vmatprep.subr.mxu0 0.0
        %813 = vmatpush1.msra.mxu0 0.0
        %814 = vmatprep.subr.mxu0 0.0
        %815 = vmatpush1.msra.mxu0 0.0
        %816 = vmatprep.subr.mxu0 0.0
        %817 = vmatpush1.msra.mxu0 0.0
        %818 = vmatprep.subr.mxu0 0.0
        %819 = vmatpush1.msra.mxu0 0.0
        %820 = vmatprep.subr.mxu0 0.0
        %821 = vmatpush1.msra.mxu0 0.0
        %v822 = vand.u32 %v228, 4294901760
        %823 = vmatprep.subr.mxu0 %v822
        %v824 = vand.u32 %v227, 4294901760
        %825 = vmatpush1.msra.mxu0 %v824
        %826 = vmatprep.subr.mxu0 0.0
        %827 = vmatpush2.msra.mxu0 0.0
        %828 = vmatprep.subr.mxu0 0.0
        %829 = vmatpush2.msra.mxu0 0.0
        %830 = vmatprep.subr.mxu0 0.0
        %831 = vmatpush2.msra.mxu0 0.0
        %832 = vmatprep.subr.mxu0 0.0
        %833 = vmatpush2.msra.mxu0 0.0
        %834 = vmatprep.subr.mxu0 0.0
        %835 = vmatpush2.msra.mxu0 0.0
        %836 = vmatprep.subr.mxu0 0.0
        %837 = vmatpush2.msra.mxu0 0.0
        %838 = vmatprep.subr.mxu0 0.0
        %839 = vmatpush2.msra.mxu0 0.0
        %840 = vmatprep.subr.mxu0 0.0
        %841 = vmatpush2.msra.mxu0 0.0
        %842 = vmatprep.subr.mxu0 0.0
        %843 = vmatpush2.msra.mxu0 0.0
        %844 = vmatprep.subr.mxu0 0.0
        %845 = vmatpush2.msra.mxu0 0.0
        %846 = vmatprep.subr.mxu0 0.0
        %847 = vmatpush2.msra.mxu0 0.0
        %848 = vmatprep.subr.mxu0 0.0
        %849 = vmatpush2.msra.mxu0 0.0
        %850 = vmatprep.subr.mxu0 0.0
        %851 = vmatpush2.msra.mxu0 0.0
        %852 = vmatprep.subr.mxu0 0.0
        %853 = vmatpush2.msra.mxu0 0.0
        %854 = vmatprep.subr.mxu0 0.0
        %855 = vmatpush2.msra.mxu0 0.0
        %856 = vmatprep.subr.mxu0 0.0
        %857 = vmatpush2.msra.mxu0 0.0
        %858 = vmatprep.mubr.f32.mxu0 0.0
        %v859 = vand.u32 %v264, 4294901760
        %860 = vmatmul.mubr.f32.gmra.mxu0 %v859
        %v861 = vpop.f32.mrf.mxu0
        %v862 = vadd.f32 %v767, %v861
        %v863 = vpop.f32.mrf.mxu0
        %v864 = vadd.f32 %v769, %v863
        %865 = vmatprep.mubr.f32.mxu0 0.0
        %v866 = vand.u32 %v267, 4294901760
        %867 = vmatmul.mubr.f32.gmra.mxu0 %v866
        %v868 = vpop.f32.mrf.mxu0
        %v869 = vadd.f32 %v774, %v868
        %v870 = vpop.f32.mrf.mxu0
        %v871 = vadd.f32 %v776, %v870
        %872 = vmatprep.mubr.f32.mxu0 0.0
        %v873 = vand.u32 %v270, 4294901760
        %874 = vmatmul.mubr.f32.gmra.mxu0 %v873
        %v875 = vpop.f32.mrf.mxu0
        %v876 = vadd.f32 %v781, %v875
        %v877 = vpop.f32.mrf.mxu0
        %v878 = vadd.f32 %v783, %v877
        %879 = vmatprep.mubr.f32.mxu0 0.0
        %v880 = vand.u32 %v273, 4294901760
        %881 = vmatmul.mubr.f32.gmra.mxu0 %v880
        %v882 = vpop.f32.mrf.mxu0
        %v883 = vadd.f32 %v788, %v882
        %v884 = vpop.f32.mrf.mxu0
        %v885 = vadd.f32 %v790, %v884
        %886 = vdwg.mxu0
        %887 = vst [vmem:[%s199] sm:$0xff] %v862
        %888 = vst [vmem:[%s199 + $0x8] sm:$0xff] %v864
        %889 = vst [vmem:[%s199 + $0x10] sm:$0xff] %v869
        %890 = vst [vmem:[%s199 + $0x18] sm:$0xff] %v871
        %891 = vst [vmem:[%s199 + $0x20] sm:$0xff] %v876
        %892 = vst [vmem:[%s199 + $0x28] sm:$0xff] %v878
        %893 = vst [vmem:[%s199 + $0x30] sm:$0xff] %v883
        %894 = vst [vmem:[%s199 + $0x38] sm:$0xff] %v885
        %s895 = sand.u32 %s117, 1
        %s896 = scalar_lea.sflag [#allocation3], %s895
        %s897 = sand.u32 %s117, 1
        %s898 = smul.addr %s897, 64
        %s899 = scalar_lea.vmem [#allocation2], %s898
        // Predicated region
        $region33: #{tpu_custom_call.1} parent=31 // pred_check
          %p900 = pneg %p127
        $region34: #{tpu_custom_call.1} parent=31 // pred_check_branch
          %902 = sbr.rel (%p900) target = $region36
        $region35: #{tpu_custom_call.1} parent=31 // pred_region
          %s903 = smul.u32 2, %s22
          %s905 = ssub.s32 1024, 1024
          %906 = vsyncadd %s896, %s905
          %s907 = smul.addr %s21, 8
          %s908 = sadd.s32 %s903, %s907
          %s909 = smul.addr %s908, 128
          %s910 = scalar_lea.hbm %s3, %s909
          %s911 = sshll.u32 %s899, 4
          %s912 = int_to_ptr.vmem [resolvable:$true] %s911
          %917 = dma.vmem_to_hbm [thread:$0]  %s912, 1024, %s910, %s896, 256, 256, 16
        $region36: #{tpu_custom_call.1} parent=31 // pred_fallthru
          _
      $region32: #{tpu_custom_call.1} parent=5 // pred_fallthru
        _
      %p918 = scmp.le.s32.totalorder 2, %s12
      // Predicated region
      $region37: #{tpu_custom_call.1} parent=5 // pred_check
        %p919 = pneg %p918
      $region38: #{tpu_custom_call.1} parent=5 // pred_check_branch
        %921 = sbr.rel (%p919) target = $region40
      $region39: #{tpu_custom_call.1} parent=5 // pred_region
        %s922 = ssub.s32 %s12, 2
        // Predicated region
        $region41: #{tpu_custom_call.1} parent=39 // pred_check
          %p923 = pneg %p133
        $region42: #{tpu_custom_call.1} parent=39 // pred_check_branch
          %925 = sbr.rel (%p923) target = $region44
        $region43: #{tpu_custom_call.1} parent=39 // pred_region
          %s926 = sand.u32 %s118, 1
          %s927 = scalar_lea.sflag [#allocation3], %s926
          %s928 = sand.u32 %s118, 1
          %s929 = smul.addr %s928, 64
          %s930 = scalar_lea.vmem [#allocation2], %s929
          %931 = dma.done %s927, 1024
        $region44: #{tpu_custom_call.1} parent=39 // pred_fallthru
          _
      $region40: #{tpu_custom_call.1} parent=5 // pred_fallthru
        _
    $region6: #{tpu_custom_call.1} parent=1 // loop_footer
      %s16 = sadd.s32 1, %s12
    $region7: #{tpu_custom_call.1} parent=1 // loop_footer_branch
      %11 = sbr.rel target = $region3
    $region8: #{tpu_custom_call.1} parent=1 // loop_exit
      _
    %932 = vsyncpa [#allocation3], 1
    %s933 = scalar_lea.sflag [#allocation3], 1
    %934 = vsyncpa %s933, 1

</llo_original>
